<compile_context>
chip_gen: v7x
topology: tpu7x:2x2x1
jax: 0.10.0
libtpu: 0.0.40
codegen_flags: <defaults>
</compile_context>

<pallas_src>
import functools

import jax
import jax.numpy as jnp
from jax.experimental import pallas as pl
from jax.experimental.pallas import tpu as pltpu


def _round_up(x, m):
    return (x + m - 1) // m * m


def _crop_classifier_kernel(patch_ref, wconv_ref, bconv_ref, mask_ref,
                            wfc_ref, bfc_ref, out_ref, *, TN, HW, KP, CP):
    # --- Conv2d(k, stride=1, pad=k//2, bias=False) as one im2col matmul ---
    # (TN*HW, KP) @ (KP, CP), bf16 inputs, f32 accumulation on the MXU.
    patches = patch_ref[...].reshape(TN * HW, KP)
    feat = jnp.dot(patches, wconv_ref[...], preferred_element_type=jnp.float32)

    # --- folded BatchNorm2d bias + ReLU (f32 elementwise) ---
    feat = jnp.maximum(feat + bconv_ref[...], 0.0)           # (TN*HW, CP)

    # --- masked global average pool, vectorized over the batch tile ---
    feat = feat.reshape(TN, HW, CP)
    m = mask_ref[...]                                        # (TN, HW) f32
    num = jnp.sum(feat * m[:, :, None], axis=1)              # (TN, CP)
    den = jnp.sum(m, axis=1, keepdims=True)                  # (TN, 1)
    # NOTE: an all-zero mask row divides by zero (NaN/Inf), exactly like the
    # PyTorch module; no guard is added to preserve semantics.
    pooled = num / den

    # TODO(synk): nn.Dropout(p=0.5) is stochastic in train mode; implemented as
    # identity (eval-mode semantics).

    # --- fc: Linear(Cout, n_classes), lane-dense padded output ---
    out_ref[...] = (jnp.dot(pooled, wfc_ref[...],
                            preferred_element_type=jnp.float32)
                    + bfc_ref[...])


def crop_classifier_forward(image_nchw, mask_nhw, params, *, kernel_size=3,
                            eps=1e-5, batch_tile=8,
                            matmul_dtype=jnp.bfloat16):
    N, Cin, H, W = image_nchw.shape
    K = kernel_size
    Cout = params["conv_w"].shape[-1]
    n_classes = params["fc_w"].shape[-1]
    HW = H * W

    KP = _round_up(max(K * K * Cin, 128), 128)    # padded contraction depth
    CP = _round_up(max(Cout, 128), 128)           # padded conv out-channels
    NCP = _round_up(max(n_classes, 128), 128)     # padded fc out-classes

    # ---- wrapper glue (layout plumbing, runs once under jit) ----
    # Fold BatchNorm (inference, running stats) into conv weight + bias.
    scale = params["bn_gamma"] * jax.lax.rsqrt(params["bn_var"] + eps)  # (Cout,)
    shift = params["bn_beta"] - params["bn_mean"] * scale               # (Cout,)
    w2d = (params["conv_w"] * scale).reshape(K * K * Cin, Cout)
    w2d = jnp.pad(w2d, ((0, KP - K * K * Cin), (0, CP - Cout))).astype(matmul_dtype)
    bconv = jnp.pad(shift, (0, CP - Cout)).reshape(1, CP).astype(jnp.float32)

    wfc = jnp.pad(params["fc_w"],
                  ((0, CP - Cout), (0, NCP - n_classes))).astype(jnp.float32)
    bfc = jnp.pad(params["fc_b"],
                  (0, NCP - n_classes)).reshape(1, NCP).astype(jnp.float32)

    # im2col patches: NCHW -> NHWC, spatial zero pad, gather K*K taps, pad the
    # contraction dim to KP (lane-dense last dim = 128).
    x = jnp.transpose(image_nchw, (0, 2, 3, 1)).astype(jnp.float32)
    p = K // 2
    xpad = jnp.pad(x, ((0, 0), (p, p), (p, p), (0, 0)))
    taps = [xpad[:, dy:dy + H, dx:dx + W, :]
            for dy in range(K) for dx in range(K)]
    patches = jnp.concatenate(taps, axis=-1).reshape(N, HW, K * K * Cin)

    TN = min(batch_tile, N)
    NP = pl.cdiv(N, TN) * TN
    patches = jnp.pad(patches,
                      ((0, NP - N), (0, 0), (0, KP - K * K * Cin))
                      ).astype(matmul_dtype)
    mask_flat = mask_nhw.reshape(N, HW).astype(jnp.float32)
    # Pad batch rows of the mask with ones so padded rows don't divide by zero
    # (they are sliced off below anyway).
    mask_flat = jnp.pad(mask_flat, ((0, NP - N), (0, 0)), constant_values=1.0)

    kernel = functools.partial(_crop_classifier_kernel,
                               TN=TN, HW=HW, KP=KP, CP=CP)

    out = pl.pallas_call(
        kernel,
        out_shape=jax.ShapeDtypeStruct((NP, NCP), jnp.float32),
        grid=(NP // TN,),
        in_specs=[
            pl.BlockSpec((TN, HW, KP), lambda i: (i, 0, 0)),   # patches (tiled)
            pl.BlockSpec((KP, CP), lambda i: (0, 0)),          # folded conv w
            pl.BlockSpec((1, CP), lambda i: (0, 0)),           # folded BN bias
            pl.BlockSpec((TN, HW), lambda i: (i, 0)),          # mask (tiled)
            pl.BlockSpec((CP, NCP), lambda i: (0, 0)),         # fc weight
            pl.BlockSpec((1, NCP), lambda i: (0, 0)),          # fc bias
        ],
        out_specs=pl.BlockSpec((TN, NCP), lambda i: (i, 0)),
        compiler_params=pltpu.CompilerParams(
            dimension_semantics=("parallel",),
            vmem_limit_bytes=32 * 1024 * 1024),  # tiles sized well under v7x's 64 MiB
    )(patches, w2d, bconv, mask_flat, wfc, bfc)

    return out[:N, :n_classes]


def init_params(key, n_channels, n_classes, kernel_size=3, n_filters=32):
    # Matches ModelMixin._init_weights: conv/linear weights ~ N(0, 1e-4),
    # linear bias = 0; BatchNorm2d default init (gamma=1, beta=0, running
    # mean=0, running var=1). Conv weight stored HWIO (K, K, Cin, Cout).
    k_conv, k_fc = jax.random.split(key, 2)
    K, Cin, Cout = kernel_size, n_channels, n_filters
    return {
        "conv_w": 1e-4 * jax.random.normal(k_conv, (K, K, Cin, Cout), jnp.float32),
        "bn_gamma": jnp.ones((Cout,), jnp.float32),
        "bn_beta": jnp.zeros((Cout,), jnp.float32),
        "bn_mean": jnp.zeros((Cout,), jnp.float32),
        "bn_var": jnp.ones((Cout,), jnp.float32),
        "fc_w": 1e-4 * jax.random.normal(k_fc, (Cout, n_classes), jnp.float32),
        "fc_b": jnp.zeros((n_classes,), jnp.float32),
    }


def reference_forward(image_nchw, mask_nhw, params, eps=1e-5):
    # Pure-JAX f32 reference matching the PyTorch forward (eval mode).
    conv = jax.lax.conv_general_dilated(
        image_nchw, params["conv_w"], window_strides=(1, 1), padding="SAME",
        dimension_numbers=("NCHW", "HWIO", "NCHW"))
    gamma = params["bn_gamma"].reshape(1, -1, 1, 1)
    beta = params["bn_beta"].reshape(1, -1, 1, 1)
    mean = params["bn_mean"].reshape(1, -1, 1, 1)
    var = params["bn_var"].reshape(1, -1, 1, 1)
    feat = jnp.maximum((conv - mean) * gamma / jnp.sqrt(var + eps) + beta, 0.0)
    m = mask_nhw[:, None, :, :]
    pooled = (feat * m).sum((-2, -1)) / m.sum((-2, -1))
    return pooled @ params["fc_w"] + params["fc_b"][None, :]


if __name__ == "__main__":
    key = jax.random.PRNGKey(0)
    k_param, k_img, k_mask = jax.random.split(key, 3)

    N, Cin, H, W = 2, 4, 16, 16
    n_classes = 8

    params = init_params(k_param, n_channels=Cin, n_classes=n_classes)

    image = jax.random.normal(k_img, (N, Cin, H, W), jnp.float32)
    mask = (jax.random.uniform(k_mask, (N, H, W)) > 0.3).astype(jnp.float32)
    mask = mask.at[:, 0, 0].set(1.0)  # guarantee non-zero denominator

    fwd = jax.jit(crop_classifier_forward)
    out = jax.block_until_ready(fwd(image, mask, params))

    ref = jax.block_until_ready(reference_forward(image, mask, params))
    assert out.shape == (N, n_classes)
    # bf16 matmul inputs with f32 accumulation: loosen tolerance accordingly
    # (outputs are ~1e-7 in magnitude with 1e-4-scale weights).
    assert jnp.allclose(out, ref, rtol=2e-2, atol=5e-9), "mismatch vs reference"

    print("KERNEL_OK")
</pallas_src>

<mosaic_0001>
module attributes {stable_mosaic.version = 11 : i64} {
  func.func @_crop_classifier_kernel(%arg0: i32, %arg1: memref<2x256x128xbf16, #tpu.memory_space<vmem>>, %arg2: memref<128x128xbf16, #tpu.memory_space<vmem>>, %arg3: memref<1x128xf32, #tpu.memory_space<vmem>>, %arg4: memref<2x256xf32, #tpu.memory_space<vmem>>, %arg5: memref<128x128xf32, #tpu.memory_space<vmem>>, %arg6: memref<1x128xf32, #tpu.memory_space<vmem>>, %arg7: memref<2x128xf32, #tpu.memory_space<vmem>>) attributes {dimension_semantics = [#tpu.dimension_semantics<parallel>], iteration_bounds = array<i64: 1>, scalar_prefetch = 0 : i64, scratch_operands = 0 : i64, tpu.core_type = #tpu.core_type<tc>, window_params = [{transform_indices = @transform_0, window_bounds = array<i64: 2, 256, 128>}, {pipeline_mode = #tpu.pipeline_mode<synchronous>, transform_indices = @transform_1, window_bounds = array<i64: 128, 128>}, {pipeline_mode = #tpu.pipeline_mode<synchronous>, transform_indices = @transform_2, window_bounds = array<i64: 1, 128>}, {transform_indices = @transform_3, window_bounds = array<i64: 2, 256>}, {pipeline_mode = #tpu.pipeline_mode<synchronous>, transform_indices = @transform_4, window_bounds = array<i64: 128, 128>}, {pipeline_mode = #tpu.pipeline_mode<synchronous>, transform_indices = @transform_5, window_bounds = array<i64: 1, 128>}, {transform_indices = @transform_6, window_bounds = array<i64: 2, 128>}]} {
    %c0 = arith.constant 0 : index
    %c0_0 = arith.constant 0 : index
    %c0_1 = arith.constant 0 : index
    %0 = vector.load %arg1[%c0, %c0_0, %c0_1] : memref<2x256x128xbf16, #tpu.memory_space<vmem>>, vector<2x256x128xbf16>
    %1 = vector.shape_cast %0 : vector<2x256x128xbf16> to vector<512x128xbf16>
    %c0_2 = arith.constant 0 : index
    %c0_3 = arith.constant 0 : index
    %2 = vector.load %arg2[%c0_2, %c0_3] : memref<128x128xbf16, #tpu.memory_space<vmem>>, vector<128x128xbf16>
    %cst = arith.constant dense<0.000000e+00> : vector<512x128xf32>
    %3 = tpu.matmul %1, %2, %cst {dimension_numbers = #tpu.dot_dimension_numbers<[1], [0], [0], [1], [0, 0, 1, 1], [], []>} : vector<512x128xbf16>, vector<128x128xbf16>, vector<512x128xf32> -> vector<512x128xf32>
    %c0_4 = arith.constant 0 : index
    %c0_5 = arith.constant 0 : index
    %4 = vector.load %arg3[%c0_4, %c0_5] : memref<1x128xf32, #tpu.memory_space<vmem>>, vector<1x128xf32>
    %5 = vector.broadcast %4 : vector<1x128xf32> to vector<512x128xf32>
    %6 = arith.addf %3, %5 : vector<512x128xf32>
    %cst_6 = arith.constant 0.000000e+00 : f32
    %7 = vector.broadcast %cst_6 : f32 to vector<512x128xf32>
    %8 = arith.maximumf %6, %7 : vector<512x128xf32>
    %9 = vector.shape_cast %8 : vector<512x128xf32> to vector<2x256x128xf32>
    %c0_7 = arith.constant 0 : index
    %c0_8 = arith.constant 0 : index
    %10 = vector.load %arg4[%c0_7, %c0_8] : memref<2x256xf32, #tpu.memory_space<vmem>>, vector<2x256xf32>
    %11 = vector.shape_cast %10 : vector<2x256xf32> to vector<2x256x1xf32>
    %12 = vector.broadcast %11 : vector<2x256x1xf32> to vector<2x256x128xf32>
    %13 = arith.mulf %9, %12 : vector<2x256x128xf32>
    %cst_9 = arith.constant dense<0.000000e+00> : vector<2x128xf32>
    %14 = vector.multi_reduction <add>, %13, %cst_9 [1] : vector<2x256x128xf32> to vector<2x128xf32>
    %cst_10 = arith.constant dense<0.000000e+00> : vector<2xf32>
    %15 = vector.multi_reduction <add>, %10, %cst_10 [1] : vector<2x256xf32> to vector<2xf32>
    %16 = vector.shape_cast %15 : vector<2xf32> to vector<2x1xf32>
    %17 = vector.broadcast %16 : vector<2x1xf32> to vector<2x128xf32>
    %18 = arith.divf %14, %17 : vector<2x128xf32>
    %c0_11 = arith.constant 0 : index
    %c0_12 = arith.constant 0 : index
    %19 = vector.load %arg5[%c0_11, %c0_12] : memref<128x128xf32, #tpu.memory_space<vmem>>, vector<128x128xf32>
    %cst_13 = arith.constant dense<0.000000e+00> : vector<2x128xf32>
    %20 = tpu.matmul %18, %19, %cst_13 {dimension_numbers = #tpu.dot_dimension_numbers<[1], [0], [0], [1], [0, 0, 1, 1], [], []>} : vector<2x128xf32>, vector<128x128xf32>, vector<2x128xf32> -> vector<2x128xf32>
    %c0_14 = arith.constant 0 : index
    %c0_15 = arith.constant 0 : index
    %21 = vector.load %arg6[%c0_14, %c0_15] : memref<1x128xf32, #tpu.memory_space<vmem>>, vector<1x128xf32>
    %22 = vector.broadcast %21 : vector<1x128xf32> to vector<2x128xf32>
    %23 = arith.addf %20, %22 : vector<2x128xf32>
    %c0_16 = arith.constant 0 : index
    %c0_17 = arith.constant 0 : index
    %24 = vector.load %arg7[%c0_16, %c0_17] : memref<2x128xf32, #tpu.memory_space<vmem>>, vector<2x128xf32>
    tpu.vector_store %arg7[%c0_16, %c0_17], %23 {strides = array<i32>} : memref<2x128xf32, #tpu.memory_space<vmem>>, vector<2x128xf32>,
    return
  }
  func.func @transform_0(%arg0: i32) -> (i32, i32, i32) {
    %c0_i32 = arith.constant 0 : i32
    %c0_i32_0 = arith.constant 0 : i32
    %c0_i32_1 = arith.constant 0 : i32
    return %arg0, %c0_i32, %c0_i32_0 : i32, i32, i32
  }
  func.func @transform_1(%arg0: i32) -> (i32, i32) {
    %c0_i32 = arith.constant 0 : i32
    %c0_i32_0 = arith.constant 0 : i32
    %c0_i32_1 = arith.constant 0 : i32
    return %c0_i32, %c0_i32_0 : i32, i32
  }
  func.func @transform_2(%arg0: i32) -> (i32, i32) {
    %c0_i32 = arith.constant 0 : i32
    %c0_i32_0 = arith.constant 0 : i32
    %c0_i32_1 = arith.constant 0 : i32
    return %c0_i32, %c0_i32_0 : i32, i32
  }
  func.func @transform_3(%arg0: i32) -> (i32, i32) {
    %c0_i32 = arith.constant 0 : i32
    %c0_i32_0 = arith.constant 0 : i32
    return %arg0, %c0_i32 : i32, i32
  }
  func.func @transform_4(%arg0: i32) -> (i32, i32) {
    %c0_i32 = arith.constant 0 : i32
    %c0_i32_0 = arith.constant 0 : i32
    %c0_i32_1 = arith.constant 0 : i32
    return %c0_i32, %c0_i32_0 : i32, i32
  }
  func.func @transform_5(%arg0: i32) -> (i32, i32) {
    %c0_i32 = arith.constant 0 : i32
    %c0_i32_0 = arith.constant 0 : i32
    %c0_i32_1 = arith.constant 0 : i32
    return %c0_i32, %c0_i32_0 : i32, i32
  }
  func.func @transform_6(%arg0: i32) -> (i32, i32) {
    %c0_i32 = arith.constant 0 : i32
    %c0_i32_0 = arith.constant 0 : i32
    return %arg0, %c0_i32 : i32, i32
  }
}

</mosaic_0001>

<llo_original>
// kernel: crop_classifier_forward.1
$region0: #{crop_classifier_forward.1}
  #allocation0 [shape = 'u32[]', space=smem, size = 0x4, offset = 0x4, fixed_abs, tag = 'smem constant byte address 0x4 - core index']
  #allocation1 [shape = 'u32[144,128]{1,0:T(1,128)}', space=vmem, size = 0x12000, scoped, tag = 'internal scratch']
  %s0 = inlined_call_operand.vmem [shape: bf16[2,256,128], index: 0, kind: input, shape index: {}]
  %s1 = inlined_call_operand.vmem [shape: bf16[128,128], index: 1, kind: input, shape index: {}]
  %s2 = inlined_call_operand.vmem [shape: f32[1,128], index: 2, kind: input, shape index: {}]
  %s3 = inlined_call_operand.vmem [shape: f32[2,256], index: 3, kind: input, shape index: {}]
  %s4 = inlined_call_operand.vmem [shape: f32[128,128], index: 4, kind: input, shape index: {}]
  %s5 = inlined_call_operand.vmem [shape: f32[1,128], index: 5, kind: input, shape index: {}]
  %s6 = inlined_call_operand.hbm [shape: f32[2,128], index: 6, kind: output, shape index: {}]
  %s7 = sld [smem:[#allocation0]]
  $region34: #{crop_classifier_forward.1} parent=0
    _
  %s9 = ssub.s32 1, %s7
  %s10 = scalar_select 0, %s9, %s7
  $region1: #{crop_classifier_forward.1} parent=0
    #allocation2 [shape = 'u8[1024]{0}', space=vmem, size = 0x400, scoped, tag = 'output window, operand 0, single buffered']
    #allocation3 [shape = 's32[1]{0}', space=sflag, size = 0x4, scoped, tag = 'scoped memory for crop_classifier_forward.1']
    %11 = vsyncpa [#allocation3], 0
    // Predicated region
    $region2: #{crop_classifier_forward.1} parent=1 // pred_check
      _
    $region3: #{crop_classifier_forward.1} parent=1 // pred_check_branch
      %13 = sbr.rel (0) target = $region5
    $region4: #{crop_classifier_forward.1} parent=1 // pred_region
      _
    $region5: #{crop_classifier_forward.1} parent=1 // pred_fallthru
      _
    // Predicated region
    $region6: #{crop_classifier_forward.1} parent=1 // pred_check
      _
    $region7: #{crop_classifier_forward.1} parent=1 // pred_check_branch
      %15 = sbr.rel (0) target = $region9
    $region8: #{crop_classifier_forward.1} parent=1 // pred_region
      _
    $region9: #{crop_classifier_forward.1} parent=1 // pred_fallthru
      _
    // Predicated region
    $region10: #{crop_classifier_forward.1} parent=1 // pred_check
      _
    $region11: #{crop_classifier_forward.1} parent=1 // pred_check_branch
      %17 = sbr.rel (0) target = $region13
    $region12: #{crop_classifier_forward.1} parent=1 // pred_region
      _
    $region13: #{crop_classifier_forward.1} parent=1 // pred_fallthru
      _
    // Predicated region
    $region14: #{crop_classifier_forward.1} parent=1 // pred_check
      _
    $region15: #{crop_classifier_forward.1} parent=1 // pred_check_branch
      %19 = sbr.rel (0) target = $region17
    $region16: #{crop_classifier_forward.1} parent=1 // pred_region
      _
    $region17: #{crop_classifier_forward.1} parent=1 // pred_fallthru
      _
    // Predicated region
    $region18: #{crop_classifier_forward.1} parent=1 // pred_check
      _
    $region19: #{crop_classifier_forward.1} parent=1 // pred_check_branch
      %21 = sbr.rel (0) target = $region21
    $region20: #{crop_classifier_forward.1} parent=1 // pred_region
      _
    $region21: #{crop_classifier_forward.1} parent=1 // pred_fallthru
      _
    // Predicated region
    $region22: #{crop_classifier_forward.1} parent=1 // pred_check
      _
    $region23: #{crop_classifier_forward.1} parent=1 // pred_check_branch
      %23 = sbr.rel (0) target = $region25
    $region24: #{crop_classifier_forward.1} parent=1 // pred_region
      _
    $region25: #{crop_classifier_forward.1} parent=1 // pred_fallthru
      _
    %v25 = vld [vmem:[%s0] sm:$0xf]
    %v26 = vld [vmem:[%s0 + $0x4] sm:$0xf]
    %v27 = vld [vmem:[%s0 + $0x8] sm:$0xf]
    %v28 = vld [vmem:[%s0 + $0xc] sm:$0xf]
    %v29 = vld [vmem:[%s0 + $0x10] sm:$0xf]
    %v30 = vld [vmem:[%s0 + $0x14] sm:$0xf]
    %v31 = vld [vmem:[%s0 + $0x18] sm:$0xf]
    %v32 = vld [vmem:[%s0 + $0x1c] sm:$0xf]
    %v33 = vld [vmem:[%s0 + $0x20] sm:$0xf]
    %v34 = vld [vmem:[%s0 + $0x24] sm:$0xf]
    %v35 = vld [vmem:[%s0 + $0x28] sm:$0xf]
    %v36 = vld [vmem:[%s0 + $0x2c] sm:$0xf]
    %v37 = vld [vmem:[%s0 + $0x30] sm:$0xf]
    %v38 = vld [vmem:[%s0 + $0x34] sm:$0xf]
    %v39 = vld [vmem:[%s0 + $0x38] sm:$0xf]
    %v40 = vld [vmem:[%s0 + $0x3c] sm:$0xf]
    %v41 = vld [vmem:[%s0 + $0x40] sm:$0xf]
    %v42 = vld [vmem:[%s0 + $0x44] sm:$0xf]
    %v43 = vld [vmem:[%s0 + $0x48] sm:$0xf]
    %v44 = vld [vmem:[%s0 + $0x4c] sm:$0xf]
    %v45 = vld [vmem:[%s0 + $0x50] sm:$0xf]
    %v46 = vld [vmem:[%s0 + $0x54] sm:$0xf]
    %v47 = vld [vmem:[%s0 + $0x58] sm:$0xf]
    %v48 = vld [vmem:[%s0 + $0x5c] sm:$0xf]
    %v49 = vld [vmem:[%s0 + $0x60] sm:$0xf]
    %v50 = vld [vmem:[%s0 + $0x64] sm:$0xf]
    %v51 = vld [vmem:[%s0 + $0x68] sm:$0xf]
    %v52 = vld [vmem:[%s0 + $0x6c] sm:$0xf]
    %v53 = vld [vmem:[%s0 + $0x70] sm:$0xf]
    %v54 = vld [vmem:[%s0 + $0x74] sm:$0xf]
    %v55 = vld [vmem:[%s0 + $0x78] sm:$0xf]
    %v56 = vld [vmem:[%s0 + $0x7c] sm:$0xf]
    %v57 = vld [vmem:[%s0 + $0x80] sm:$0xf]
    %v58 = vld [vmem:[%s0 + $0x84] sm:$0xf]
    %v59 = vld [vmem:[%s0 + $0x88] sm:$0xf]
    %v60 = vld [vmem:[%s0 + $0x8c] sm:$0xf]
    %v61 = vld [vmem:[%s0 + $0x90] sm:$0xf]
    %v62 = vld [vmem:[%s0 + $0x94] sm:$0xf]
    %v63 = vld [vmem:[%s0 + $0x98] sm:$0xf]
    %v64 = vld [vmem:[%s0 + $0x9c] sm:$0xf]
    %v65 = vld [vmem:[%s0 + $0xa0] sm:$0xf]
    %v66 = vld [vmem:[%s0 + $0xa4] sm:$0xf]
    %v67 = vld [vmem:[%s0 + $0xa8] sm:$0xf]
    %v68 = vld [vmem:[%s0 + $0xac] sm:$0xf]
    %v69 = vld [vmem:[%s0 + $0xb0] sm:$0xf]
    %v70 = vld [vmem:[%s0 + $0xb4] sm:$0xf]
    %v71 = vld [vmem:[%s0 + $0xb8] sm:$0xf]
    %v72 = vld [vmem:[%s0 + $0xbc] sm:$0xf]
    %v73 = vld [vmem:[%s0 + $0xc0] sm:$0xf]
    %v74 = vld [vmem:[%s0 + $0xc4] sm:$0xf]
    %v75 = vld [vmem:[%s0 + $0xc8] sm:$0xf]
    %v76 = vld [vmem:[%s0 + $0xcc] sm:$0xf]
    %v77 = vld [vmem:[%s0 + $0xd0] sm:$0xf]
    %v78 = vld [vmem:[%s0 + $0xd4] sm:$0xf]
    %v79 = vld [vmem:[%s0 + $0xd8] sm:$0xf]
    %v80 = vld [vmem:[%s0 + $0xdc] sm:$0xf]
    %v81 = vld [vmem:[%s0 + $0xe0] sm:$0xf]
    %v82 = vld [vmem:[%s0 + $0xe4] sm:$0xf]
    %v83 = vld [vmem:[%s0 + $0xe8] sm:$0xf]
    %v84 = vld [vmem:[%s0 + $0xec] sm:$0xf]
    %v85 = vld [vmem:[%s0 + $0xf0] sm:$0xf]
    %v86 = vld [vmem:[%s0 + $0xf4] sm:$0xf]
    %v87 = vld [vmem:[%s0 + $0xf8] sm:$0xf]
    %v88 = vld [vmem:[%s0 + $0xfc] sm:$0xf]
    %v89 = vld [vmem:[%s1] sm:$0xf]
    %v90 = vld [vmem:[%s1 + $0x4] sm:$0xf]
    %v91 = vld [vmem:[%s1 + $0x8] sm:$0xf]
    %v92 = vld [vmem:[%s1 + $0xc] sm:$0xf]
    %v93 = vld [vmem:[%s1 + $0x10] sm:$0xf]
    %v94 = vld [vmem:[%s1 + $0x14] sm:$0xf]
    %v95 = vld [vmem:[%s1 + $0x18] sm:$0xf]
    %v96 = vld [vmem:[%s1 + $0x1c] sm:$0xf]
    %v97 = vld [vmem:[%s1 + $0x20] sm:$0xf]
    %v98 = vld [vmem:[%s1 + $0x24] sm:$0xf]
    %v99 = vld [vmem:[%s1 + $0x28] sm:$0xf]
    %v100 = vld [vmem:[%s1 + $0x2c] sm:$0xf]
    %v101 = vld [vmem:[%s1 + $0x30] sm:$0xf]
    %v102 = vld [vmem:[%s1 + $0x34] sm:$0xf]
    %v103 = vld [vmem:[%s1 + $0x38] sm:$0xf]
    %v104 = vld [vmem:[%s1 + $0x3c] sm:$0xf]
    %v105 = vld [vmem:[%s2] sm:$0x1]
    %v107 = vlaneseq
    %v108 = vshrl.u32 %v107, 7
    %v109 = vsub.s32 0, %v108
    %v110 = vrot.slane %v105, %v109
    %v176 = vunpack.c.l.b16 %v25
    %v177 = vunpack.c.l.b16 %v26
    %v178 = vunpack.c.l.b16 %v27
    %v179 = vunpack.c.l.b16 %v28
    %v180 = vunpack.c.l.b16 %v29
    %v181 = vunpack.c.l.b16 %v30
    %v182 = vunpack.c.l.b16 %v31
    %v183 = vunpack.c.l.b16 %v32
    %v184 = vunpack.c.l.b16 %v33
    %v185 = vunpack.c.l.b16 %v34
    %v186 = vunpack.c.l.b16 %v35
    %v187 = vunpack.c.l.b16 %v36
    %v188 = vunpack.c.l.b16 %v37
    %v189 = vunpack.c.l.b16 %v38
    %v190 = vunpack.c.l.b16 %v39
    %v191 = vunpack.c.l.b16 %v40
    %v192 = vunpack.c.l.b16 %v41
    %v193 = vunpack.c.l.b16 %v42
    %v194 = vunpack.c.l.b16 %v43
    %v195 = vunpack.c.l.b16 %v44
    %v196 = vunpack.c.l.b16 %v45
    %v197 = vunpack.c.l.b16 %v46
    %v198 = vunpack.c.l.b16 %v47
    %v199 = vunpack.c.l.b16 %v48
    %v200 = vunpack.c.l.b16 %v49
    %v201 = vunpack.c.l.b16 %v50
    %v202 = vunpack.c.l.b16 %v51
    %v203 = vunpack.c.l.b16 %v52
    %v204 = vunpack.c.l.b16 %v53
    %v205 = vunpack.c.l.b16 %v54
    %v206 = vunpack.c.l.b16 %v55
    %v207 = vunpack.c.l.b16 %v56
    %v208 = vunpack.c.l.b16 %v57
    %v209 = vunpack.c.l.b16 %v58
    %v210 = vunpack.c.l.b16 %v59
    %v211 = vunpack.c.l.b16 %v60
    %v212 = vunpack.c.l.b16 %v61
    %v213 = vunpack.c.l.b16 %v62
    %v214 = vunpack.c.l.b16 %v63
    %v215 = vunpack.c.l.b16 %v64
    %v216 = vunpack.c.l.b16 %v65
    %v217 = vunpack.c.l.b16 %v66
    %v218 = vunpack.c.l.b16 %v67
    %v219 = vunpack.c.l.b16 %v68
    %v220 = vunpack.c.l.b16 %v69
    %v221 = vunpack.c.l.b16 %v70
    %v222 = vunpack.c.l.b16 %v71
    %v223 = vunpack.c.l.b16 %v72
    %v224 = vunpack.c.l.b16 %v73
    %v225 = vunpack.c.l.b16 %v74
    %v226 = vunpack.c.l.b16 %v75
    %v227 = vunpack.c.l.b16 %v76
    %v228 = vunpack.c.l.b16 %v77
    %v229 = vunpack.c.l.b16 %v78
    %v230 = vunpack.c.l.b16 %v79
    %v231 = vunpack.c.l.b16 %v80
    %v232 = vunpack.c.l.b16 %v81
    %v233 = vunpack.c.l.b16 %v82
    %v234 = vunpack.c.l.b16 %v83
    %v235 = vunpack.c.l.b16 %v84
    %v236 = vunpack.c.l.b16 %v85
    %v237 = vunpack.c.l.b16 %v86
    %v238 = vunpack.c.l.b16 %v87
    %v239 = vunpack.c.l.b16 %v88
    %v240 = vpack.c.b16 %v177, %v176
    %v241 = vpack.c.b16 %v179, %v178
    %v242 = vpack.c.b16 %v181, %v180
    %v243 = vpack.c.b16 %v183, %v182
    %v244 = vpack.c.b16 %v185, %v184
    %v245 = vpack.c.b16 %v187, %v186
    %v246 = vpack.c.b16 %v189, %v188
    %v247 = vpack.c.b16 %v191, %v190
    %v248 = vpack.c.b16 %v193, %v192
    %v249 = vpack.c.b16 %v195, %v194
    %v250 = vpack.c.b16 %v197, %v196
    %v251 = vpack.c.b16 %v199, %v198
    %v252 = vpack.c.b16 %v201, %v200
    %v253 = vpack.c.b16 %v203, %v202
    %v254 = vpack.c.b16 %v205, %v204
    %v255 = vpack.c.b16 %v207, %v206
    %v256 = vpack.c.b16 %v209, %v208
    %v257 = vpack.c.b16 %v211, %v210
    %v258 = vpack.c.b16 %v213, %v212
    %v259 = vpack.c.b16 %v215, %v214
    %v260 = vpack.c.b16 %v217, %v216
    %v261 = vpack.c.b16 %v219, %v218
    %v262 = vpack.c.b16 %v221, %v220
    %v263 = vpack.c.b16 %v223, %v222
    %v264 = vpack.c.b16 %v225, %v224
    %v265 = vpack.c.b16 %v227, %v226
    %v266 = vpack.c.b16 %v229, %v228
    %v267 = vpack.c.b16 %v231, %v230
    %v268 = vpack.c.b16 %v233, %v232
    %v269 = vpack.c.b16 %v235, %v234
    %v270 = vpack.c.b16 %v237, %v236
    %v271 = vpack.c.b16 %v239, %v238
    %v320 = vunpack.c.l.b16 %v89
    %v321 = vunpack.c.l.b16 %v90
    %v322 = vunpack.c.l.b16 %v91
    %v323 = vunpack.c.l.b16 %v92
    %v324 = vunpack.c.l.b16 %v93
    %v325 = vunpack.c.l.b16 %v94
    %v326 = vunpack.c.l.b16 %v95
    %v327 = vunpack.c.l.b16 %v96
    %v328 = vunpack.c.l.b16 %v97
    %v329 = vunpack.c.l.b16 %v98
    %v330 = vunpack.c.l.b16 %v99
    %v331 = vunpack.c.l.b16 %v100
    %v332 = vunpack.c.l.b16 %v101
    %v333 = vunpack.c.l.b16 %v102
    %v334 = vunpack.c.l.b16 %v103
    %v335 = vunpack.c.l.b16 %v104
    %v336 = vpack.c.b16 %v321, %v320
    %v337 = vpack.c.b16 %v323, %v322
    %v338 = vpack.c.b16 %v325, %v324
    %v339 = vpack.c.b16 %v327, %v326
    %v340 = vpack.c.b16 %v329, %v328
    %v341 = vpack.c.b16 %v331, %v330
    %v342 = vpack.c.b16 %v333, %v332
    %v343 = vpack.c.b16 %v335, %v334
    %352 = vmatprep.subr.bf16.mxu0 0
    %353 = vmatpush1.bf16.msra.mxu0 %v336
    %354 = vmatprep.subr.bf16.mxu0 0
    %355 = vmatpush1.bf16.msra.mxu0 %v337
    %356 = vmatprep.subr.bf16.mxu0 0
    %357 = vmatpush1.bf16.msra.mxu0 %v338
    %358 = vmatprep.subr.bf16.mxu0 0
    %359 = vmatpush1.bf16.msra.mxu0 %v339
    %360 = vmatprep.subr.bf16.mxu0 0
    %361 = vmatpush1.bf16.msra.mxu0 %v340
    %362 = vmatprep.subr.bf16.mxu0 0
    %363 = vmatpush1.bf16.msra.mxu0 %v341
    %364 = vmatprep.subr.bf16.mxu0 0
    %365 = vmatpush1.bf16.msra.mxu0 %v342
    %366 = vmatprep.subr.bf16.mxu0 0
    %367 = vmatpush1.bf16.msra.mxu0 %v343
    %368 = vmatprep.subr.bf16.mxu0 0
    %369 = vmatpush1.bf16.msra.mxu0 0
    %370 = vmatprep.subr.bf16.mxu0 0
    %371 = vmatpush1.bf16.msra.mxu0 0
    %372 = vmatprep.subr.bf16.mxu0 0
    %373 = vmatpush1.bf16.msra.mxu0 0
    %374 = vmatprep.subr.bf16.mxu0 0
    %375 = vmatpush1.bf16.msra.mxu0 0
    %376 = vmatprep.subr.bf16.mxu0 0
    %377 = vmatpush1.bf16.msra.mxu0 0
    %378 = vmatprep.subr.bf16.mxu0 0
    %379 = vmatpush1.bf16.msra.mxu0 0
    %380 = vmatprep.subr.bf16.mxu0 0
    %381 = vmatpush1.bf16.msra.mxu0 0
    %382 = vmatprep.subr.bf16.mxu0 0
    %383 = vmatpush1.bf16.msra.mxu0 0
    %384 = vmatprep.mubr.bf16.mxu0 0
    %385 = vmatmul.mubr.bf16.gmra.mrb[0].mxu0 %v240
    %v386 = vpop.f32.mrb[0].mxu0
    %v387 = vadd.f32 %v110, %v386
    %v388 = vpop.f32.mrb[0].mxu0
    %v389 = vpop.f32.mrb[0].mxu0
    %v390 = vadd.f32 %v110, %v389
    %v391 = vpop.f32.mrb[0].mxu0
    %392 = vmatprep.mubr.bf16.mxu0 0
    %393 = vmatmul.mubr.bf16.gmra.mrb[0].mxu0 %v241
    %v394 = vpop.f32.mrb[0].mxu0
    %v395 = vadd.f32 %v110, %v394
    %v396 = vpop.f32.mrb[0].mxu0
    %v397 = vpop.f32.mrb[0].mxu0
    %v398 = vadd.f32 %v110, %v397
    %v399 = vpop.f32.mrb[0].mxu0
    %400 = vmatprep.mubr.bf16.mxu0 0
    %401 = vmatmul.mubr.bf16.gmra.mrb[0].mxu0 %v242
    %v402 = vpop.f32.mrb[0].mxu0
    %v403 = vadd.f32 %v110, %v402
    %v404 = vpop.f32.mrb[0].mxu0
    %v405 = vpop.f32.mrb[0].mxu0
    %v406 = vadd.f32 %v110, %v405
    %v407 = vpop.f32.mrb[0].mxu0
    %408 = vmatprep.mubr.bf16.mxu0 0
    %409 = vmatmul.mubr.bf16.gmra.mrb[0].mxu0 %v243
    %v410 = vpop.f32.mrb[0].mxu0
    %v411 = vadd.f32 %v110, %v410
    %v412 = vpop.f32.mrb[0].mxu0
    %v413 = vpop.f32.mrb[0].mxu0
    %v414 = vadd.f32 %v110, %v413
    %v415 = vpop.f32.mrb[0].mxu0
    %416 = vmatprep.mubr.bf16.mxu0 0
    %417 = vmatmul.mubr.bf16.gmra.mrb[0].mxu0 %v244
    %v418 = vpop.f32.mrb[0].mxu0
    %v419 = vadd.f32 %v110, %v418
    %v420 = vpop.f32.mrb[0].mxu0
    %v421 = vpop.f32.mrb[0].mxu0
    %v422 = vadd.f32 %v110, %v421
    %v423 = vpop.f32.mrb[0].mxu0
    %424 = vmatprep.mubr.bf16.mxu0 0
    %425 = vmatmul.mubr.bf16.gmra.mrb[0].mxu0 %v245
    %v426 = vpop.f32.mrb[0].mxu0
    %v427 = vadd.f32 %v110, %v426
    %v428 = vpop.f32.mrb[0].mxu0
    %v429 = vpop.f32.mrb[0].mxu0
    %v430 = vadd.f32 %v110, %v429
    %v431 = vpop.f32.mrb[0].mxu0
    %432 = vmatprep.mubr.bf16.mxu0 0
    %433 = vmatmul.mubr.bf16.gmra.mrb[0].mxu0 %v246
    %v434 = vpop.f32.mrb[0].mxu0
    %v435 = vadd.f32 %v110, %v434
    %v436 = vpop.f32.mrb[0].mxu0
    %v437 = vpop.f32.mrb[0].mxu0
    %v438 = vadd.f32 %v110, %v437
    %v439 = vpop.f32.mrb[0].mxu0
    %440 = vmatprep.mubr.bf16.mxu0 0
    %441 = vmatmul.mubr.bf16.gmra.mrb[0].mxu0 %v247
    %v442 = vpop.f32.mrb[0].mxu0
    %v443 = vadd.f32 %v110, %v442
    %v444 = vpop.f32.mrb[0].mxu0
    %v445 = vpop.f32.mrb[0].mxu0
    %v446 = vadd.f32 %v110, %v445
    %v447 = vpop.f32.mrb[0].mxu0
    %448 = vmatprep.mubr.bf16.mxu0 0
    %449 = vmatmul.mubr.bf16.gmra.mrb[0].mxu0 %v248
    %v450 = vpop.f32.mrb[0].mxu0
    %v451 = vadd.f32 %v110, %v450
    %v452 = vpop.f32.mrb[0].mxu0
    %v453 = vpop.f32.mrb[0].mxu0
    %v454 = vadd.f32 %v110, %v453
    %v455 = vpop.f32.mrb[0].mxu0
    %456 = vmatprep.mubr.bf16.mxu0 0
    %457 = vmatmul.mubr.bf16.gmra.mrb[0].mxu0 %v249
    %v458 = vpop.f32.mrb[0].mxu0
    %v459 = vadd.f32 %v110, %v458
    %v460 = vpop.f32.mrb[0].mxu0
    %v461 = vpop.f32.mrb[0].mxu0
    %v462 = vadd.f32 %v110, %v461
    %v463 = vpop.f32.mrb[0].mxu0
    %464 = vmatprep.mubr.bf16.mxu0 0
    %465 = vmatmul.mubr.bf16.gmra.mrb[0].mxu0 %v250
    %v466 = vpop.f32.mrb[0].mxu0
    %v467 = vadd.f32 %v110, %v466
    %v468 = vpop.f32.mrb[0].mxu0
    %v469 = vpop.f32.mrb[0].mxu0
    %v470 = vadd.f32 %v110, %v469
    %v471 = vpop.f32.mrb[0].mxu0
    %472 = vmatprep.mubr.bf16.mxu0 0
    %473 = vmatmul.mubr.bf16.gmra.mrb[0].mxu0 %v251
    %v474 = vpop.f32.mrb[0].mxu0
    %v475 = vadd.f32 %v110, %v474
    %v476 = vpop.f32.mrb[0].mxu0
    %v477 = vpop.f32.mrb[0].mxu0
    %v478 = vadd.f32 %v110, %v477
    %v479 = vpop.f32.mrb[0].mxu0
    %480 = vmatprep.mubr.bf16.mxu0 0
    %481 = vmatmul.mubr.bf16.gmra.mrb[0].mxu0 %v252
    %v482 = vpop.f32.mrb[0].mxu0
    %v483 = vadd.f32 %v110, %v482
    %v484 = vpop.f32.mrb[0].mxu0
    %v485 = vpop.f32.mrb[0].mxu0
    %v486 = vadd.f32 %v110, %v485
    %v487 = vpop.f32.mrb[0].mxu0
    %488 = vmatprep.mubr.bf16.mxu0 0
    %489 = vmatmul.mubr.bf16.gmra.mrb[0].mxu0 %v253
    %v490 = vpop.f32.mrb[0].mxu0
    %v491 = vadd.f32 %v110, %v490
    %v492 = vpop.f32.mrb[0].mxu0
    %v493 = vpop.f32.mrb[0].mxu0
    %v494 = vadd.f32 %v110, %v493
    %v495 = vpop.f32.mrb[0].mxu0
    %496 = vmatprep.mubr.bf16.mxu0 0
    %497 = vmatmul.mubr.bf16.gmra.mrb[0].mxu0 %v254
    %v498 = vpop.f32.mrb[0].mxu0
    %v499 = vadd.f32 %v110, %v498
    %v500 = vpop.f32.mrb[0].mxu0
    %v501 = vpop.f32.mrb[0].mxu0
    %v502 = vadd.f32 %v110, %v501
    %v503 = vpop.f32.mrb[0].mxu0
    %504 = vmatprep.mubr.bf16.mxu0 0
    %505 = vmatmul.mubr.bf16.gmra.mrb[0].mxu0 %v255
    %v506 = vpop.f32.mrb[0].mxu0
    %v507 = vadd.f32 %v110, %v506
    %v508 = vpop.f32.mrb[0].mxu0
    %v509 = vpop.f32.mrb[0].mxu0
    %v510 = vadd.f32 %v110, %v509
    %v511 = vpop.f32.mrb[0].mxu0
    %512 = vmatprep.mubr.bf16.mxu0 0
    %513 = vmatmul.mubr.bf16.gmra.mrb[0].mxu0 %v256
    %v514 = vpop.f32.mrb[0].mxu0
    %v515 = vadd.f32 %v110, %v514
    %v516 = vpop.f32.mrb[0].mxu0
    %v517 = vpop.f32.mrb[0].mxu0
    %v518 = vadd.f32 %v110, %v517
    %v519 = vpop.f32.mrb[0].mxu0
    %520 = vmatprep.mubr.bf16.mxu0 0
    %521 = vmatmul.mubr.bf16.gmra.mrb[0].mxu0 %v257
    %v522 = vpop.f32.mrb[0].mxu0
    %v523 = vadd.f32 %v110, %v522
    %v524 = vpop.f32.mrb[0].mxu0
    %v525 = vpop.f32.mrb[0].mxu0
    %v526 = vadd.f32 %v110, %v525
    %v527 = vpop.f32.mrb[0].mxu0
    %528 = vmatprep.mubr.bf16.mxu0 0
    %529 = vmatmul.mubr.bf16.gmra.mrb[0].mxu0 %v258
    %v530 = vpop.f32.mrb[0].mxu0
    %v531 = vadd.f32 %v110, %v530
    %v532 = vpop.f32.mrb[0].mxu0
    %v533 = vpop.f32.mrb[0].mxu0
    %v534 = vadd.f32 %v110, %v533
    %v535 = vpop.f32.mrb[0].mxu0
    %536 = vmatprep.mubr.bf16.mxu0 0
    %537 = vmatmul.mubr.bf16.gmra.mrb[0].mxu0 %v259
    %v538 = vpop.f32.mrb[0].mxu0
    %v539 = vadd.f32 %v110, %v538
    %v540 = vpop.f32.mrb[0].mxu0
    %v541 = vpop.f32.mrb[0].mxu0
    %v542 = vadd.f32 %v110, %v541
    %v543 = vpop.f32.mrb[0].mxu0
    %544 = vmatprep.mubr.bf16.mxu0 0
    %545 = vmatmul.mubr.bf16.gmra.mrb[0].mxu0 %v260
    %v546 = vpop.f32.mrb[0].mxu0
    %v547 = vadd.f32 %v110, %v546
    %v548 = vpop.f32.mrb[0].mxu0
    %v549 = vpop.f32.mrb[0].mxu0
    %v550 = vadd.f32 %v110, %v549
    %v551 = vpop.f32.mrb[0].mxu0
    %552 = vmatprep.mubr.bf16.mxu0 0
    %553 = vmatmul.mubr.bf16.gmra.mrb[0].mxu0 %v261
    %v554 = vpop.f32.mrb[0].mxu0
    %v555 = vadd.f32 %v110, %v554
    %v556 = vpop.f32.mrb[0].mxu0
    %v557 = vpop.f32.mrb[0].mxu0
    %v558 = vadd.f32 %v110, %v557
    %v559 = vpop.f32.mrb[0].mxu0
    %560 = vmatprep.mubr.bf16.mxu0 0
    %561 = vmatmul.mubr.bf16.gmra.mrb[0].mxu0 %v262
    %v562 = vpop.f32.mrb[0].mxu0
    %v563 = vadd.f32 %v110, %v562
    %v564 = vpop.f32.mrb[0].mxu0
    %v565 = vpop.f32.mrb[0].mxu0
    %v566 = vadd.f32 %v110, %v565
    %v567 = vpop.f32.mrb[0].mxu0
    %568 = vmatprep.mubr.bf16.mxu0 0
    %569 = vmatmul.mubr.bf16.gmra.mrb[0].mxu0 %v263
    %v570 = vpop.f32.mrb[0].mxu0
    %v571 = vadd.f32 %v110, %v570
    %v572 = vpop.f32.mrb[0].mxu0
    %v573 = vpop.f32.mrb[0].mxu0
    %v574 = vadd.f32 %v110, %v573
    %v575 = vpop.f32.mrb[0].mxu0
    %576 = vmatprep.mubr.bf16.mxu0 0
    %577 = vmatmul.mubr.bf16.gmra.mrb[0].mxu0 %v264
    %v578 = vpop.f32.mrb[0].mxu0
    %v579 = vadd.f32 %v110, %v578
    %v580 = vpop.f32.mrb[0].mxu0
    %v581 = vpop.f32.mrb[0].mxu0
    %v582 = vadd.f32 %v110, %v581
    %v583 = vpop.f32.mrb[0].mxu0
    %584 = vmatprep.mubr.bf16.mxu0 0
    %585 = vmatmul.mubr.bf16.gmra.mrb[0].mxu0 %v265
    %v586 = vpop.f32.mrb[0].mxu0
    %v587 = vadd.f32 %v110, %v586
    %v588 = vpop.f32.mrb[0].mxu0
    %v589 = vpop.f32.mrb[0].mxu0
    %v590 = vadd.f32 %v110, %v589
    %v591 = vpop.f32.mrb[0].mxu0
    %592 = vmatprep.mubr.bf16.mxu0 0
    %593 = vmatmul.mubr.bf16.gmra.mrb[0].mxu0 %v266
    %v594 = vpop.f32.mrb[0].mxu0
    %v595 = vadd.f32 %v110, %v594
    %v596 = vpop.f32.mrb[0].mxu0
    %v597 = vpop.f32.mrb[0].mxu0
    %v598 = vadd.f32 %v110, %v597
    %v599 = vpop.f32.mrb[0].mxu0
    %600 = vmatprep.mubr.bf16.mxu0 0
    %601 = vmatmul.mubr.bf16.gmra.mrb[0].mxu0 %v267
    %v602 = vpop.f32.mrb[0].mxu0
    %v603 = vadd.f32 %v110, %v602
    %v604 = vpop.f32.mrb[0].mxu0
    %v605 = vpop.f32.mrb[0].mxu0
    %v606 = vadd.f32 %v110, %v605
    %v607 = vpop.f32.mrb[0].mxu0
    %608 = vmatprep.mubr.bf16.mxu0 0
    %609 = vmatmul.mubr.bf16.gmra.mrb[0].mxu0 %v268
    %v610 = vpop.f32.mrb[0].mxu0
    %v611 = vadd.f32 %v110, %v610
    %v612 = vpop.f32.mrb[0].mxu0
    %v613 = vpop.f32.mrb[0].mxu0
    %v614 = vadd.f32 %v110, %v613
    %v615 = vpop.f32.mrb[0].mxu0
    %616 = vmatprep.mubr.bf16.mxu0 0
    %617 = vmatmul.mubr.bf16.gmra.mrb[0].mxu0 %v269
    %v618 = vpop.f32.mrb[0].mxu0
    %v619 = vadd.f32 %v110, %v618
    %v620 = vpop.f32.mrb[0].mxu0
    %v621 = vpop.f32.mrb[0].mxu0
    %v622 = vadd.f32 %v110, %v621
    %v623 = vpop.f32.mrb[0].mxu0
    %624 = vmatprep.mubr.bf16.mxu0 0
    %625 = vmatmul.mubr.bf16.gmra.mrb[0].mxu0 %v270
    %v626 = vpop.f32.mrb[0].mxu0
    %v627 = vadd.f32 %v110, %v626
    %v628 = vpop.f32.mrb[0].mxu0
    %v629 = vpop.f32.mrb[0].mxu0
    %v630 = vadd.f32 %v110, %v629
    %v631 = vpop.f32.mrb[0].mxu0
    %632 = vmatprep.mubr.bf16.mxu0 0
    %633 = vmatmul.mubr.bf16.gmra.mrb[0].mxu0 %v271
    %v634 = vpop.f32.mrb[0].mxu0
    %v635 = vadd.f32 %v110, %v634
    %v636 = vpop.f32.mrb[0].mxu0
    %v637 = vpop.f32.mrb[0].mxu0
    %v638 = vadd.f32 %v110, %v637
    %v639 = vpop.f32.mrb[0].mxu0
    %640 = vdwg.mxu0
    %v641 = vmax.f32 %v387, 0.0
    %v642 = vmax.f32 %v390, 0.0
    %v643 = vmax.f32 %v395, 0.0
    %v644 = vmax.f32 %v398, 0.0
    %v645 = vmax.f32 %v403, 0.0
    %v646 = vmax.f32 %v406, 0.0
    %v647 = vmax.f32 %v411, 0.0
    %v648 = vmax.f32 %v414, 0.0
    %v649 = vmax.f32 %v419, 0.0
    %v650 = vmax.f32 %v422, 0.0
    %v651 = vmax.f32 %v427, 0.0
    %v652 = vmax.f32 %v430, 0.0
    %v653 = vmax.f32 %v435, 0.0
    %v654 = vmax.f32 %v438, 0.0
    %v655 = vmax.f32 %v443, 0.0
    %v656 = vmax.f32 %v446, 0.0
    %v657 = vmax.f32 %v451, 0.0
    %v658 = vmax.f32 %v454, 0.0
    %v659 = vmax.f32 %v459, 0.0
    %v660 = vmax.f32 %v462, 0.0
    %v661 = vmax.f32 %v467, 0.0
    %v662 = vmax.f32 %v470, 0.0
    %v663 = vmax.f32 %v475, 0.0
    %v664 = vmax.f32 %v478, 0.0
    %v665 = vmax.f32 %v483, 0.0
    %v666 = vmax.f32 %v486, 0.0
    %v667 = vmax.f32 %v491, 0.0
    %v668 = vmax.f32 %v494, 0.0
    %v669 = vmax.f32 %v499, 0.0
    %v670 = vmax.f32 %v502, 0.0
    %v671 = vmax.f32 %v507, 0.0
    %v672 = vmax.f32 %v510, 0.0
    %v673 = vmax.f32 %v515, 0.0
    %v674 = vmax.f32 %v518, 0.0
    %v675 = vmax.f32 %v523, 0.0
    %v676 = vmax.f32 %v526, 0.0
    %v677 = vmax.f32 %v531, 0.0
    %v678 = vmax.f32 %v534, 0.0
    %v679 = vmax.f32 %v539, 0.0
    %v680 = vmax.f32 %v542, 0.0
    %v681 = vmax.f32 %v547, 0.0
    %v682 = vmax.f32 %v550, 0.0
    %v683 = vmax.f32 %v555, 0.0
    %v684 = vmax.f32 %v558, 0.0
    %v685 = vmax.f32 %v563, 0.0
    %v686 = vmax.f32 %v566, 0.0
    %v687 = vmax.f32 %v571, 0.0
    %v688 = vmax.f32 %v574, 0.0
    %v689 = vmax.f32 %v579, 0.0
    %v690 = vmax.f32 %v582, 0.0
    %v691 = vmax.f32 %v587, 0.0
    %v692 = vmax.f32 %v590, 0.0
    %v693 = vmax.f32 %v595, 0.0
    %v694 = vmax.f32 %v598, 0.0
    %v695 = vmax.f32 %v603, 0.0
    %v696 = vmax.f32 %v606, 0.0
    %v697 = vmax.f32 %v611, 0.0
    %v698 = vmax.f32 %v614, 0.0
    %v699 = vmax.f32 %v619, 0.0
    %v700 = vmax.f32 %v622, 0.0
    %v701 = vmax.f32 %v627, 0.0
    %v702 = vmax.f32 %v630, 0.0
    %v703 = vmax.f32 %v635, 0.0
    %v704 = vmax.f32 %v638, 0.0
    %v705 = vld [vmem:[%s3] sm:$0xf]
    %v708 = vunpack.c.l.s4 1983009808
    %v709 = vunpack.c.0.s8 %v708
    %v710 = vlaneseq
    %v711 = vshrl.u32 %v710, 7
    %v712 = vsub.s32 %v709, %v711
    %v713 = vrot.slane %v705, %v712
    %v714 = vcombine.high %v713, %v713
    %v717 = vlaneseq
    %v718 = vshrl.u32 %v717, 7
    %v719 = vsub.s32 0, %v718
    %v720 = vrot.slane %v713, %v719
    %722 = vbcast.lane.b32.xlu0 %v720, 256
    %v723 = vpop.permute.xlu0 %722
    %s725 = sor.u32 256, 8
    %726 = vbcast.lane.b32.xlu0 %v720, %s725
    %v727 = vpop.permute.xlu0 %726
    %s729 = sor.u32 256, 16
    %730 = vbcast.lane.b32.xlu0 %v720, %s729
    %v731 = vpop.permute.xlu0 %730
    %s733 = sor.u32 256, 24
    %734 = vbcast.lane.b32.xlu0 %v720, %s733
    %v735 = vpop.permute.xlu0 %734
    %s737 = sor.u32 256, 32
    %738 = vbcast.lane.b32.xlu0 %v720, %s737
    %v739 = vpop.permute.xlu0 %738
    %s741 = sor.u32 256, 40
    %742 = vbcast.lane.b32.xlu0 %v720, %s741
    %v743 = vpop.permute.xlu0 %742
    %s745 = sor.u32 256, 48
    %746 = vbcast.lane.b32.xlu0 %v720, %s745
    %v747 = vpop.permute.xlu0 %746
    %s749 = sor.u32 256, 56
    %750 = vbcast.lane.b32.xlu0 %v720, %s749
    %v751 = vpop.permute.xlu0 %750
    %s753 = sor.u32 256, 64
    %754 = vbcast.lane.b32.xlu0 %v720, %s753
    %v755 = vpop.permute.xlu0 %754
    %s757 = sor.u32 256, 72
    %758 = vbcast.lane.b32.xlu0 %v720, %s757
    %v759 = vpop.permute.xlu0 %758
    %s761 = sor.u32 256, 80
    %762 = vbcast.lane.b32.xlu0 %v720, %s761
    %v763 = vpop.permute.xlu0 %762
    %s765 = sor.u32 256, 88
    %766 = vbcast.lane.b32.xlu0 %v720, %s765
    %v767 = vpop.permute.xlu0 %766
    %s769 = sor.u32 256, 96
    %770 = vbcast.lane.b32.xlu0 %v720, %s769
    %v771 = vpop.permute.xlu0 %770
    %s773 = sor.u32 256, 104
    %774 = vbcast.lane.b32.xlu0 %v720, %s773
    %v775 = vpop.permute.xlu0 %774
    %s777 = sor.u32 256, 112
    %778 = vbcast.lane.b32.xlu0 %v720, %s777
    %v779 = vpop.permute.xlu0 %778
    %s781 = sor.u32 256, 120
    %782 = vbcast.lane.b32.xlu0 %v720, %s781
    %v783 = vpop.permute.xlu0 %782
    %v784 = vlaneseq
    %v785 = vshrl.u32 %v784, 7
    %v786 = vsub.s32 0, %v785
    %v787 = vrot.slane %v714, %v786
    %789 = vbcast.lane.b32.xlu0 %v787, 256
    %v790 = vpop.permute.xlu0 %789
    %s792 = sor.u32 256, 8
    %793 = vbcast.lane.b32.xlu0 %v787, %s792
    %v794 = vpop.permute.xlu0 %793
    %s796 = sor.u32 256, 16
    %797 = vbcast.lane.b32.xlu0 %v787, %s796
    %v798 = vpop.permute.xlu0 %797
    %s800 = sor.u32 256, 24
    %801 = vbcast.lane.b32.xlu0 %v787, %s800
    %v802 = vpop.permute.xlu0 %801
    %s804 = sor.u32 256, 32
    %805 = vbcast.lane.b32.xlu0 %v787, %s804
    %v806 = vpop.permute.xlu0 %805
    %s808 = sor.u32 256, 40
    %809 = vbcast.lane.b32.xlu0 %v787, %s808
    %v810 = vpop.permute.xlu0 %809
    %s812 = sor.u32 256, 48
    %813 = vbcast.lane.b32.xlu0 %v787, %s812
    %v814 = vpop.permute.xlu0 %813
    %s816 = sor.u32 256, 56
    %817 = vbcast.lane.b32.xlu0 %v787, %s816
    %v818 = vpop.permute.xlu0 %817
    %s820 = sor.u32 256, 64
    %821 = vbcast.lane.b32.xlu0 %v787, %s820
    %v822 = vpop.permute.xlu0 %821
    %s824 = sor.u32 256, 72
    %825 = vbcast.lane.b32.xlu0 %v787, %s824
    %v826 = vpop.permute.xlu0 %825
    %s828 = sor.u32 256, 80
    %829 = vbcast.lane.b32.xlu0 %v787, %s828
    %v830 = vpop.permute.xlu0 %829
    %s832 = sor.u32 256, 88
    %833 = vbcast.lane.b32.xlu0 %v787, %s832
    %v834 = vpop.permute.xlu0 %833
    %s836 = sor.u32 256, 96
    %837 = vbcast.lane.b32.xlu0 %v787, %s836
    %v838 = vpop.permute.xlu0 %837
    %s840 = sor.u32 256, 104
    %841 = vbcast.lane.b32.xlu0 %v787, %s840
    %v842 = vpop.permute.xlu0 %841
    %s844 = sor.u32 256, 112
    %845 = vbcast.lane.b32.xlu0 %v787, %s844
    %v846 = vpop.permute.xlu0 %845
    %s848 = sor.u32 256, 120
    %849 = vbcast.lane.b32.xlu0 %v787, %s848
    %v850 = vpop.permute.xlu0 %849
    %v851 = vlaneseq
    %v852 = vshrl.u32 %v851, 7
    %v853 = vsub.s32 1, %v852
    %v854 = vrot.slane %v713, %v853
    %856 = vbcast.lane.b32.xlu0 %v854, 256
    %v857 = vpop.permute.xlu0 %856
    %s859 = sor.u32 256, 8
    %860 = vbcast.lane.b32.xlu0 %v854, %s859
    %v861 = vpop.permute.xlu0 %860
    %s863 = sor.u32 256, 16
    %864 = vbcast.lane.b32.xlu0 %v854, %s863
    %v865 = vpop.permute.xlu0 %864
    %s867 = sor.u32 256, 24
    %868 = vbcast.lane.b32.xlu0 %v854, %s867
    %v869 = vpop.permute.xlu0 %868
    %s871 = sor.u32 256, 32
    %872 = vbcast.lane.b32.xlu0 %v854, %s871
    %v873 = vpop.permute.xlu0 %872
    %s875 = sor.u32 256, 40
    %876 = vbcast.lane.b32.xlu0 %v854, %s875
    %v877 = vpop.permute.xlu0 %876
    %s879 = sor.u32 256, 48
    %880 = vbcast.lane.b32.xlu0 %v854, %s879
    %v881 = vpop.permute.xlu0 %880
    %s883 = sor.u32 256, 56
    %884 = vbcast.lane.b32.xlu0 %v854, %s883
    %v885 = vpop.permute.xlu0 %884
    %s887 = sor.u32 256, 64
    %888 = vbcast.lane.b32.xlu0 %v854, %s887
    %v889 = vpop.permute.xlu0 %888
    %s891 = sor.u32 256, 72
    %892 = vbcast.lane.b32.xlu0 %v854, %s891
    %v893 = vpop.permute.xlu0 %892
    %s895 = sor.u32 256, 80
    %896 = vbcast.lane.b32.xlu0 %v854, %s895
    %v897 = vpop.permute.xlu0 %896
    %s899 = sor.u32 256, 88
    %900 = vbcast.lane.b32.xlu0 %v854, %s899
    %v901 = vpop.permute.xlu0 %900
    %s903 = sor.u32 256, 96
    %904 = vbcast.lane.b32.xlu0 %v854, %s903
    %v905 = vpop.permute.xlu0 %904
    %s907 = sor.u32 256, 104
    %908 = vbcast.lane.b32.xlu0 %v854, %s907
    %v909 = vpop.permute.xlu0 %908
    %s911 = sor.u32 256, 112
    %912 = vbcast.lane.b32.xlu0 %v854, %s911
    %v913 = vpop.permute.xlu0 %912
    %s915 = sor.u32 256, 120
    %916 = vbcast.lane.b32.xlu0 %v854, %s915
    %v917 = vpop.permute.xlu0 %916
    %v918 = vlaneseq
    %v919 = vshrl.u32 %v918, 7
    %v920 = vsub.s32 1, %v919
    %v921 = vrot.slane %v714, %v920
    %923 = vbcast.lane.b32.xlu0 %v921, 256
    %v924 = vpop.permute.xlu0 %923
    %s926 = sor.u32 256, 8
    %927 = vbcast.lane.b32.xlu0 %v921, %s926
    %v928 = vpop.permute.xlu0 %927
    %s930 = sor.u32 256, 16
    %931 = vbcast.lane.b32.xlu0 %v921, %s930
    %v932 = vpop.permute.xlu0 %931
    %s934 = sor.u32 256, 24
    %935 = vbcast.lane.b32.xlu0 %v921, %s934
    %v936 = vpop.permute.xlu0 %935
    %s938 = sor.u32 256, 32
    %939 = vbcast.lane.b32.xlu0 %v921, %s938
    %v940 = vpop.permute.xlu0 %939
    %s942 = sor.u32 256, 40
    %943 = vbcast.lane.b32.xlu0 %v921, %s942
    %v944 = vpop.permute.xlu0 %943
    %s946 = sor.u32 256, 48
    %947 = vbcast.lane.b32.xlu0 %v921, %s946
    %v948 = vpop.permute.xlu0 %947
    %s950 = sor.u32 256, 56
    %951 = vbcast.lane.b32.xlu0 %v921, %s950
    %v952 = vpop.permute.xlu0 %951
    %s954 = sor.u32 256, 64
    %955 = vbcast.lane.b32.xlu0 %v921, %s954
    %v956 = vpop.permute.xlu0 %955
    %s958 = sor.u32 256, 72
    %959 = vbcast.lane.b32.xlu0 %v921, %s958
    %v960 = vpop.permute.xlu0 %959
    %s962 = sor.u32 256, 80
    %963 = vbcast.lane.b32.xlu0 %v921, %s962
    %v964 = vpop.permute.xlu0 %963
    %s966 = sor.u32 256, 88
    %967 = vbcast.lane.b32.xlu0 %v921, %s966
    %v968 = vpop.permute.xlu0 %967
    %s970 = sor.u32 256, 96
    %971 = vbcast.lane.b32.xlu0 %v921, %s970
    %v972 = vpop.permute.xlu0 %971
    %s974 = sor.u32 256, 104
    %975 = vbcast.lane.b32.xlu0 %v921, %s974
    %v976 = vpop.permute.xlu0 %975
    %s978 = sor.u32 256, 112
    %979 = vbcast.lane.b32.xlu0 %v921, %s978
    %v980 = vpop.permute.xlu0 %979
    %s982 = sor.u32 256, 120
    %983 = vbcast.lane.b32.xlu0 %v921, %s982
    %v984 = vpop.permute.xlu0 %983
    %v985 = vmul.f32 %v641, %v723
    %v986 = vmul.f32 %v642, %v727
    %v987 = vmul.f32 %v643, %v731
    %v988 = vmul.f32 %v644, %v735
    %v989 = vmul.f32 %v645, %v739
    %v990 = vmul.f32 %v646, %v743
    %v991 = vmul.f32 %v647, %v747
    %v992 = vmul.f32 %v648, %v751
    %v993 = vmul.f32 %v649, %v755
    %v994 = vmul.f32 %v650, %v759
    %v995 = vmul.f32 %v651, %v763
    %v996 = vmul.f32 %v652, %v767
    %v997 = vmul.f32 %v653, %v771
    %v998 = vmul.f32 %v654, %v775
    %v999 = vmul.f32 %v655, %v779
    %v1000 = vmul.f32 %v656, %v783
    %v1001 = vmul.f32 %v657, %v790
    %v1002 = vmul.f32 %v658, %v794
    %v1003 = vmul.f32 %v659, %v798
    %v1004 = vmul.f32 %v660, %v802
    %v1005 = vmul.f32 %v661, %v806
    %v1006 = vmul.f32 %v662, %v810
    %v1007 = vmul.f32 %v663, %v814
    %v1008 = vmul.f32 %v664, %v818
    %v1009 = vmul.f32 %v665, %v822
    %v1010 = vmul.f32 %v666, %v826
    %v1011 = vmul.f32 %v667, %v830
    %v1012 = vmul.f32 %v668, %v834
    %v1013 = vmul.f32 %v669, %v838
    %v1014 = vmul.f32 %v670, %v842
    %v1015 = vmul.f32 %v671, %v846
    %v1016 = vmul.f32 %v672, %v850
    %v1017 = vmul.f32 %v673, %v857
    %v1018 = vmul.f32 %v674, %v861
    %v1019 = vmul.f32 %v675, %v865
    %v1020 = vmul.f32 %v676, %v869
    %v1021 = vmul.f32 %v677, %v873
    %v1022 = vmul.f32 %v678, %v877
    %v1023 = vmul.f32 %v679, %v881
    %v1024 = vmul.f32 %v680, %v885
    %v1025 = vmul.f32 %v681, %v889
    %v1026 = vmul.f32 %v682, %v893
    %v1027 = vmul.f32 %v683, %v897
    %v1028 = vmul.f32 %v684, %v901
    %v1029 = vmul.f32 %v685, %v905
    %v1030 = vmul.f32 %v686, %v909
    %v1031 = vmul.f32 %v687, %v913
    %v1032 = vmul.f32 %v688, %v917
    %v1033 = vmul.f32 %v689, %v924
    %v1034 = vmul.f32 %v690, %v928
    %v1035 = vmul.f32 %v691, %v932
    %v1036 = vmul.f32 %v692, %v936
    %v1037 = vmul.f32 %v693, %v940
    %v1038 = vmul.f32 %v694, %v944
    %v1039 = vmul.f32 %v695, %v948
    %v1040 = vmul.f32 %v696, %v952
    %v1041 = vmul.f32 %v697, %v956
    %v1042 = vmul.f32 %v698, %v960
    %v1043 = vmul.f32 %v699, %v964
    %v1044 = vmul.f32 %v700, %v968
    %v1045 = vmul.f32 %v701, %v972
    %v1046 = vmul.f32 %v702, %v976
    %v1047 = vmul.f32 %v703, %v980
    %v1048 = vmul.f32 %v704, %v984
    %v1049 = vadd.f32 %v985, %v986
    %v1050 = vadd.f32 %v1049, %v987
    %v1051 = vadd.f32 %v1050, %v988
    %v1052 = vadd.f32 %v1051, %v989
    %v1053 = vadd.f32 %v1052, %v990
    %v1054 = vadd.f32 %v1053, %v991
    %v1055 = vadd.f32 %v1054, %v992
    %v1056 = vadd.f32 %v1055, %v993
    %v1057 = vadd.f32 %v1056, %v994
    %v1058 = vadd.f32 %v1057, %v995
    %v1059 = vadd.f32 %v1058, %v996
    %v1060 = vadd.f32 %v1059, %v997
    %v1061 = vadd.f32 %v1060, %v998
    %v1062 = vadd.f32 %v1061, %v999
    %v1063 = vadd.f32 %v1062, %v1000
    %v1064 = vadd.f32 %v1063, %v1001
    %v1065 = vadd.f32 %v1064, %v1002
    %v1066 = vadd.f32 %v1065, %v1003
    %v1067 = vadd.f32 %v1066, %v1004
    %v1068 = vadd.f32 %v1067, %v1005
    %v1069 = vadd.f32 %v1068, %v1006
    %v1070 = vadd.f32 %v1069, %v1007
    %v1071 = vadd.f32 %v1070, %v1008
    %v1072 = vadd.f32 %v1071, %v1009
    %v1073 = vadd.f32 %v1072, %v1010
    %v1074 = vadd.f32 %v1073, %v1011
    %v1075 = vadd.f32 %v1074, %v1012
    %v1076 = vadd.f32 %v1075, %v1013
    %v1077 = vadd.f32 %v1076, %v1014
    %v1078 = vadd.f32 %v1077, %v1015
    %v1079 = vadd.f32 %v1078, %v1016
    %v1080 = vrot.slane %v1079, 4
    %v1081 = vadd.f32 %v1079, %v1080
    %v1082 = vrot.slane %v1081, 2
    %v1083 = vadd.f32 %v1081, %v1082
    %v1084 = vrot.slane %v1083, 1
    %v1085 = vadd.f32 %v1083, %v1084
    %v1086 = vadd.f32 %v1017, %v1018
    %v1087 = vadd.f32 %v1086, %v1019
    %v1088 = vadd.f32 %v1087, %v1020
    %v1089 = vadd.f32 %v1088, %v1021
    %v1090 = vadd.f32 %v1089, %v1022
    %v1091 = vadd.f32 %v1090, %v1023
    %v1092 = vadd.f32 %v1091, %v1024
    %v1093 = vadd.f32 %v1092, %v1025
    %v1094 = vadd.f32 %v1093, %v1026
    %v1095 = vadd.f32 %v1094, %v1027
    %v1096 = vadd.f32 %v1095, %v1028
    %v1097 = vadd.f32 %v1096, %v1029
    %v1098 = vadd.f32 %v1097, %v1030
    %v1099 = vadd.f32 %v1098, %v1031
    %v1100 = vadd.f32 %v1099, %v1032
    %v1101 = vadd.f32 %v1100, %v1033
    %v1102 = vadd.f32 %v1101, %v1034
    %v1103 = vadd.f32 %v1102, %v1035
    %v1104 = vadd.f32 %v1103, %v1036
    %v1105 = vadd.f32 %v1104, %v1037
    %v1106 = vadd.f32 %v1105, %v1038
    %v1107 = vadd.f32 %v1106, %v1039
    %v1108 = vadd.f32 %v1107, %v1040
    %v1109 = vadd.f32 %v1108, %v1041
    %v1110 = vadd.f32 %v1109, %v1042
    %v1111 = vadd.f32 %v1110, %v1043
    %v1112 = vadd.f32 %v1111, %v1044
    %v1113 = vadd.f32 %v1112, %v1045
    %v1114 = vadd.f32 %v1113, %v1046
    %v1115 = vadd.f32 %v1114, %v1047
    %v1116 = vadd.f32 %v1115, %v1048
    %v1117 = vrot.slane %v1116, 4
    %v1118 = vadd.f32 %v1116, %v1117
    %v1119 = vrot.slane %v1118, 2
    %v1120 = vadd.f32 %v1118, %v1119
    %v1121 = vrot.slane %v1120, 1
    %v1122 = vadd.f32 %v1120, %v1121
    %vm1123 = vcmask 1041408
    %v1124 = vsel %vm1123, %v713, 0.0
    %v1125 = vsel %vm1123, %v714, 0.0
    %v1126 = vadd.f32 %v1124, %v1125
    %1127 = vadd.xlane.f32.xlu0 %v1126
    %v1128 = vpop.xlane.xlu0 %1127
    %v1130 = vrot.slane %v1128, 1
    %v1133 = vrcp.pop %v1128
    %v1134 = vmul.f32 %v1085, %v1133
    %v1135 = vrcp.pop %v1130
    %v1136 = vmul.f32 %v1122, %v1135
    %v1137 = vld [vmem:[%s4] sm:$0xff]
    %v1138 = vld [vmem:[%s4 + $0x8] sm:$0xff]
    %v1139 = vld [vmem:[%s4 + $0x10] sm:$0xff]
    %v1140 = vld [vmem:[%s4 + $0x18] sm:$0xff]
    %v1141 = vld [vmem:[%s4 + $0x20] sm:$0xff]
    %v1142 = vld [vmem:[%s4 + $0x28] sm:$0xff]
    %v1143 = vld [vmem:[%s4 + $0x30] sm:$0xff]
    %v1144 = vld [vmem:[%s4 + $0x38] sm:$0xff]
    %v1145 = vld [vmem:[%s4 + $0x40] sm:$0xff]
    %v1146 = vld [vmem:[%s4 + $0x48] sm:$0xff]
    %v1147 = vld [vmem:[%s4 + $0x50] sm:$0xff]
    %v1148 = vld [vmem:[%s4 + $0x58] sm:$0xff]
    %v1149 = vld [vmem:[%s4 + $0x60] sm:$0xff]
    %v1150 = vld [vmem:[%s4 + $0x68] sm:$0xff]
    %v1151 = vld [vmem:[%s4 + $0x70] sm:$0xff]
    %v1152 = vld [vmem:[%s4 + $0x78] sm:$0xff]
    %v1153 = vld [vmem:[%s5] sm:$0x1]
    %v1155 = vlaneseq
    %v1156 = vshrl.u32 %v1155, 7
    %v1157 = vsub.s32 0, %v1156
    %v1158 = vrot.slane %v1153, %v1157
    %v1162 = vrot.slane %v1136, 7
    %vm1163 = vcmask 1041409
    %v1164 = vsel %vm1163, %v1162, %v1134
    %1166 = vmatprep.subr.mxu0 0.0
    %1167 = vmatpush1.msra.mxu0 %v1137
    %1168 = vmatprep.subr.mxu0 0.0
    %1169 = vmatpush1.msra.mxu0 %v1138
    %1170 = vmatprep.subr.mxu0 0.0
    %1171 = vmatpush1.msra.mxu0 %v1139
    %1172 = vmatprep.subr.mxu0 0.0
    %1173 = vmatpush1.msra.mxu0 %v1140
    %1174 = vmatprep.subr.mxu0 0.0
    %1175 = vmatpush1.msra.mxu0 %v1141
    %1176 = vmatprep.subr.mxu0 0.0
    %1177 = vmatpush1.msra.mxu0 %v1142
    %1178 = vmatprep.subr.mxu0 0.0
    %1179 = vmatpush1.msra.mxu0 %v1143
    %1180 = vmatprep.subr.mxu0 0.0
    %1181 = vmatpush1.msra.mxu0 %v1144
    %1182 = vmatprep.subr.mxu0 0.0
    %1183 = vmatpush1.msra.mxu0 %v1145
    %1184 = vmatprep.subr.mxu0 0.0
    %1185 = vmatpush1.msra.mxu0 %v1146
    %1186 = vmatprep.subr.mxu0 0.0
    %1187 = vmatpush1.msra.mxu0 %v1147
    %1188 = vmatprep.subr.mxu0 0.0
    %1189 = vmatpush1.msra.mxu0 %v1148
    %1190 = vmatprep.subr.mxu0 0.0
    %1191 = vmatpush1.msra.mxu0 %v1149
    %1192 = vmatprep.subr.mxu0 0.0
    %1193 = vmatpush1.msra.mxu0 %v1150
    %1194 = vmatprep.subr.mxu0 0.0
    %1195 = vmatpush1.msra.mxu0 %v1151
    %1196 = vmatprep.subr.mxu0 0.0
    %1197 = vmatpush1.msra.mxu0 %v1152
    %1198 = vmatprep.subr.mxu0 0.0
    %1199 = vmatpush1.msra.mxu0 0.0
    %1200 = vmatprep.subr.mxu0 0.0
    %1201 = vmatpush1.msra.mxu0 0.0
    %1202 = vmatprep.subr.mxu0 0.0
    %1203 = vmatpush1.msra.mxu0 0.0
    %1204 = vmatprep.subr.mxu0 0.0
    %1205 = vmatpush1.msra.mxu0 0.0
    %1206 = vmatprep.subr.mxu0 0.0
    %1207 = vmatpush1.msra.mxu0 0.0
    %1208 = vmatprep.subr.mxu0 0.0
    %1209 = vmatpush1.msra.mxu0 0.0
    %1210 = vmatprep.subr.mxu0 0.0
    %1211 = vmatpush1.msra.mxu0 0.0
    %1212 = vmatprep.subr.mxu0 0.0
    %1213 = vmatpush1.msra.mxu0 0.0
    %1214 = vmatprep.subr.mxu0 0.0
    %1215 = vmatpush1.msra.mxu0 0.0
    %1216 = vmatprep.subr.mxu0 0.0
    %1217 = vmatpush1.msra.mxu0 0.0
    %1218 = vmatprep.subr.mxu0 0.0
    %1219 = vmatpush1.msra.mxu0 0.0
    %1220 = vmatprep.subr.mxu0 0.0
    %1221 = vmatpush1.msra.mxu0 0.0
    %1222 = vmatprep.subr.mxu0 0.0
    %1223 = vmatpush1.msra.mxu0 0.0
    %1224 = vmatprep.subr.mxu0 0.0
    %1225 = vmatpush1.msra.mxu0 0.0
    %1226 = vmatprep.subr.mxu0 0.0
    %1227 = vmatpush1.msra.mxu0 0.0
    %1228 = vmatprep.subr.mxu0 0.0
    %1229 = vmatpush1.msra.mxu0 0.0
    %1230 = vmatprep.mubr.f32.mxu0 0.0
    %1231 = vmatmul.mubr.f32.gmra.mrb[0].mxu0 %v1164
    %v1232 = vpop.f32.mrb[0].mxu0
    %v1233 = vadd.f32 %v1158, %v1232
    %v1234 = vpop.f32.mrb[0].mxu0
    %1235 = vdwg.mxu0
    %1236 = vst [vmem:[#allocation2] sm:$0x3] %v1233
    // Predicated region
    $region26: #{crop_classifier_forward.1} parent=1 // pred_check
      _
    $region27: #{crop_classifier_forward.1} parent=1 // pred_check_branch
      %1238 = sbr.rel (0) target = $region29
    $region28: #{crop_classifier_forward.1} parent=1 // pred_region
      %s1240 = ssub.s32 32, 32
      %1241 = vsyncadd [#allocation3], %s1240
      %s1243 = sshll.u32 [#allocation2], 4
      %s1244 = int_to_ptr.vmem [resolvable:$true] %s1243
      %1246 = dma.vmem_to_hbm [thread:$0]  %s1244, 32, %s6, [#allocation3]
    $region29: #{crop_classifier_forward.1} parent=1 // pred_fallthru
      _
    // Predicated region
    $region30: #{crop_classifier_forward.1} parent=1 // pred_check
      _
    $region31: #{crop_classifier_forward.1} parent=1 // pred_check_branch
      %1248 = sbr.rel (0) target = $region33
    $region32: #{crop_classifier_forward.1} parent=1 // pred_region
      %1249 = dma.done [#allocation3], 32
    $region33: #{crop_classifier_forward.1} parent=1 // pred_fallthru
      _
    %1250 = vsyncpa [#allocation3], 1

</llo_original>
